<compile_context>
chip_gen: v7x
topology: tpu7x:2x2x1
jax: 0.10.0
libtpu: 0.0.40
codegen_flags: <defaults>
</compile_context>

<pallas_src>
import functools

import jax
import jax.numpy as jnp
from jax import lax
from jax.experimental import pallas as pl
from jax.experimental.pallas import tpu as pltpu

LANES = 128
SUBLANES = 8
SUB_ROWS = 512          # rows per in-kernel sub-tile (bounds VMEM temporaries)
MID_BLOCK_ROWS = 2048   # grid-block rows for mid-size inputs


def _chip_config():
    """Returns (target rows per grid block, parallel grid chunks) per TPU gen."""
    kind = ""
    try:
        kind = jax.devices()[0].device_kind.lower()
    except Exception:
        pass
    if "v7" in kind:
        # 2 TCs; 2 inputs x 2 buffers x 4 MiB = 16 MiB < 32 MiB default scoped VMEM
        return 8192, 2
    if "v6" in kind:
        return 8192, 1
    # v5e / unknown: 2 x 2 x 2 MiB = 8 MiB buffers < 16 MiB default scoped VMEM
    return 4096, 1


def _accumulate(x, t, mask, sum_ref, cnt_ref):
    """Fold one (r, LANES) f32 chunk into the (8,128) accumulators (VPU adds)."""
    diff = jnp.where(mask, x - t, jnp.float32(0.0))   # zero BEFORE squaring
    sq = diff * diff
    msk = mask.astype(jnp.float32)
    r = x.shape[0]
    r8 = (r // SUBLANES) * SUBLANES
    if r8:
        sq8 = sq if r8 == r else sq[:r8]
        msk8 = msk if r8 == r else msk[:r8]
        sum_ref[...] += sq8.reshape(-1, SUBLANES, LANES).sum(axis=0)
        cnt_ref[...] += msk8.reshape(-1, SUBLANES, LANES).sum(axis=0)
    rem = r - r8
    if rem:  # tiny blocks only (r < 8 tail); static slice, sublane-aligned
        sum_ref[0:rem, :] += sq[r8:, :]
        cnt_ref[0:rem, :] += msk[r8:, :]


def _masked_mse_kernel(x_ref, t_ref, sum_ref, cnt_ref, *,
                       no_data_value, rows, block_rows, sub_rows,
                       inner_steps, num_blocks, num_parallel):
    c = pl.program_id(0)   # parallel chunk
    i = pl.program_id(1)   # reduction step within the chunk
    step = c * inner_steps + i

    @pl.when(i == 0)
    def _():
        sum_ref[...] = jnp.zeros_like(sum_ref)
        cnt_ref[...] = jnp.zeros_like(cnt_ref)

    def process_chunk(r0, nrows, tail):
        t = t_ref[pl.ds(r0, nrows), :]
        x = x_ref[pl.ds(r0, nrows), :].astype(jnp.float32)
        # sentinel compare in target's native dtype (matches torch .ne)
        mask = t != jnp.asarray(no_data_value, dtype=t.dtype)
        if tail:
            # only the ragged final block pays the per-element row mask
            row_ids = (lax.broadcasted_iota(jnp.int32, (nrows, LANES), 0)
                       + step * block_rows + r0)
            mask = jnp.logical_and(mask, row_ids < rows)
        _accumulate(x, t.astype(jnp.float32), mask, sum_ref, cnt_ref)

    sub_tiled = (block_rows > sub_rows) and (block_rows % sub_rows == 0)

    def process_block(tail):
        if sub_tiled:
            def body(s, carry):
                r0 = pl.multiple_of(s * sub_rows, sub_rows)
                process_chunk(r0, sub_rows, tail)
                return carry
            lax.fori_loop(0, block_rows // sub_rows, body, 0)
        else:
            process_chunk(0, block_rows, tail)

    has_ragged = (rows % block_rows) != 0               # static
    has_dupes = (inner_steps * num_parallel) > num_blocks  # static

    if has_ragged:
        last = num_blocks - 1

        @pl.when(step < last)
        def _():
            process_block(tail=False)

        @pl.when(step == last)
        def _():
            process_block(tail=True)
        # step > last: clamped duplicate block -> contributes nothing
    elif has_dupes:
        @pl.when(step < num_blocks)
        def _():
            process_block(tail=False)
    else:
        process_block(tail=False)


def masked_mse_loss(inp, target, no_data_value):
    """Masked MSE loss. inp/target: arrays of identical shape (any rank)."""
    assert inp.shape == target.shape
    n = inp.size
    if n == 0:
        return jnp.float32(jnp.nan)

    # Flatten (free reshape). Pad only if n isn't a multiple of the lane
    # width (rare for this module); padded targets carry the sentinel.
    x_flat = jnp.ravel(inp)
    t_flat = jnp.ravel(target)
    pad = (-n) % LANES
    if pad:
        x_flat = jnp.concatenate([x_flat, jnp.zeros((pad,), x_flat.dtype)])
        t_flat = jnp.concatenate(
            [t_flat, jnp.full((pad,), no_data_value, t_flat.dtype)])
    rows = (n + pad) // LANES
    x2d = x_flat.reshape(rows, LANES)
    t2d = t_flat.reshape(rows, LANES)

    target_rows, num_parallel = _chip_config()
    if rows <= MID_BLOCK_ROWS:
        block_rows = rows            # single full-dim block (always layout-legal)
    elif rows >= target_rows:
        block_rows = target_rows     # big streaming block, multiple of SUB_ROWS
    else:
        block_rows = MID_BLOCK_ROWS  # medium inputs: 2048-row blocks

    num_blocks = pl.cdiv(rows, block_rows)
    num_parallel = max(1, min(num_parallel, num_blocks))
    inner = pl.cdiv(num_blocks, num_parallel)

    def in_map(c, i):
        # Clamp so an over-provisioned chunk re-reads the last block; its
        # contribution is skipped entirely in the kernel.
        return (jnp.minimum(c * inner + i, num_blocks - 1), 0)

    kernel = functools.partial(
        _masked_mse_kernel,
        no_data_value=no_data_value,
        rows=rows,
        block_rows=block_rows,
        sub_rows=SUB_ROWS,
        inner_steps=inner,
        num_blocks=num_blocks,
        num_parallel=num_parallel,
    )

    bytes_accessed = (n * (x2d.dtype.itemsize + t2d.dtype.itemsize)
                      + 2 * num_parallel * SUBLANES * LANES * 4)

    sums, cnts = pl.pallas_call(
        kernel,
        out_shape=(
            jax.ShapeDtypeStruct((num_parallel, SUBLANES, LANES), jnp.float32),
            jax.ShapeDtypeStruct((num_parallel, SUBLANES, LANES), jnp.float32),
        ),
        grid_spec=pltpu.PrefetchScalarGridSpec(
            num_scalar_prefetch=0,
            grid=(num_parallel, inner),
            in_specs=[
                pl.BlockSpec((block_rows, LANES), in_map),
                pl.BlockSpec((block_rows, LANES), in_map),
            ],
            out_specs=(
                pl.BlockSpec((None, SUBLANES, LANES), lambda c, i: (c, 0, 0)),
                pl.BlockSpec((None, SUBLANES, LANES), lambda c, i: (c, 0, 0)),
            ),
        ),
        compiler_params=pltpu.CompilerParams(
            dimension_semantics=("parallel", "arbitrary")),
        cost_estimate=pl.CostEstimate(
            flops=6 * n, transcendentals=0, bytes_accessed=bytes_accessed),
    )(x2d, t2d)

    total_sum = jnp.sum(sums)
    total_cnt = jnp.sum(cnts)
    # Counts accumulate in f32: exact up to 2^24 per (sublane,lane) slot.
    # 0/0 -> NaN matches F.mse_loss on an empty selection.
    return total_sum / total_cnt


def _reference(inp, target, no_data_value):
    mask = target != no_data_value
    diff = jnp.where(mask, inp.astype(jnp.float32) - target.astype(jnp.float32), 0.0)
    return jnp.sum(diff * diff) / jnp.sum(mask.astype(jnp.float32))


if __name__ == "__main__":
    NO_DATA_VALUE = -9999.0
    key = jax.random.PRNGKey(0)
    keys = jax.random.split(key, 9)

    # --- primary small test, shape consistent with the module's usage ------
    shape = (2, 4, 16, 16)                     # 2048 elems -> rows=16, 1 block
    inp = jax.random.normal(keys[0], shape, dtype=jnp.float32)
    target = jax.random.normal(keys[1], shape, dtype=jnp.float32)
    drop = jax.random.bernoulli(keys[2], p=0.3, shape=shape)
    target = jnp.where(drop, jnp.float32(NO_DATA_VALUE), target)

    loss = masked_mse_loss(inp, target, NO_DATA_VALUE)
    jax.block_until_ready(loss)
    ref = _reference(inp, target, NO_DATA_VALUE)
    assert jnp.allclose(loss, ref, rtol=1e-5, atol=1e-6), (loss, ref)

    # --- medium test: multi-block, sub-tiled fold, ragged final block ------
    shape2 = (5, 9, 64, 128)                   # 368640 elems -> rows=2880
    inp2 = jax.random.normal(keys[3], shape2, dtype=jnp.float32)
    target2 = jax.random.normal(keys[4], shape2, dtype=jnp.float32)
    drop2 = jax.random.bernoulli(keys[5], p=0.3, shape=shape2)
    target2 = jnp.where(drop2, jnp.float32(NO_DATA_VALUE), target2)

    loss2 = masked_mse_loss(inp2, target2, NO_DATA_VALUE)
    jax.block_until_ready(loss2)
    ref2 = _reference(inp2, target2, NO_DATA_VALUE)
    assert jnp.allclose(loss2, ref2, rtol=1e-5, atol=1e-6), (loss2, ref2)

    # --- tiny non-lane-aligned test (pad path, sub-8-row accumulate) -------
    shape3 = (3, 5, 7)                         # 105 elems -> padded to 128
    inp3 = jax.random.normal(keys[6], shape3, dtype=jnp.float32)
    target3 = jax.random.normal(keys[7], shape3, dtype=jnp.float32)
    drop3 = jax.random.bernoulli(keys[8], p=0.3, shape=shape3)
    target3 = jnp.where(drop3, jnp.float32(NO_DATA_VALUE), target3)

    loss3 = masked_mse_loss(inp3, target3, NO_DATA_VALUE)
    jax.block_until_ready(loss3)
    ref3 = _reference(inp3, target3, NO_DATA_VALUE)
    assert jnp.allclose(loss3, ref3, rtol=1e-5, atol=1e-6), (loss3, ref3)

    print("KERNEL_OK")
</pallas_src>

<mosaic_0001>
module attributes {stable_mosaic.version = 11 : i64} {
  func.func @_masked_mse_kernel(%arg0: i32, %arg1: i32, %arg2: memref<16x128xf32, #tpu.memory_space<vmem>>, %arg3: memref<16x128xf32, #tpu.memory_space<vmem>>, %arg4: memref<1x8x128xf32, #tpu.memory_space<vmem>>, %arg5: memref<1x8x128xf32, #tpu.memory_space<vmem>>) attributes {dimension_semantics = [#tpu.dimension_semantics<parallel>, #tpu.dimension_semantics<arbitrary>], iteration_bounds = array<i64: 1, 1>, scalar_prefetch = 0 : i64, scratch_operands = 0 : i64, tpu.core_type = #tpu.core_type<tc>, window_params = [{transform_indices = @transform_0, window_bounds = array<i64: 16, 128>}, {transform_indices = @transform_1, window_bounds = array<i64: 16, 128>}, {transform_indices = @transform_2, window_bounds = array<i64: 1, 8, 128>}, {transform_indices = @transform_3, window_bounds = array<i64: 1, 8, 128>}]} {
    %c0_i32 = arith.constant 0 : i32
    %0 = arith.cmpi eq, %arg1, %c0_i32 : i32
    %1 = arith.extui %0 : i1 to i32
    %c0_i32_0 = arith.constant 0 : i32
    %2 = arith.cmpi ne, %1, %c0_i32_0 : i32
    scf.if %2 {
      %cst_19 = arith.constant 0.000000e+00 : f32
      %29 = vector.broadcast %cst_19 : f32 to vector<8x128xf32>
      %c0_20 = arith.constant 0 : index
      %c0_21 = arith.constant 0 : index
      %c0_22 = arith.constant 0 : index
      %30 = vector.load %arg4[%c0_20, %c0_21, %c0_22] : memref<1x8x128xf32, #tpu.memory_space<vmem>>, vector<1x8x128xf32>
      %31 = vector.shape_cast %30 : vector<1x8x128xf32> to vector<8x128xf32>
      %32 = vector.shape_cast %29 : vector<8x128xf32> to vector<1x8x128xf32>
      tpu.vector_store %arg4[%c0_20, %c0_21, %c0_22], %32 {strides = array<i32>} : memref<1x8x128xf32, #tpu.memory_space<vmem>>, vector<1x8x128xf32>,
      %cst_23 = arith.constant 0.000000e+00 : f32
      %33 = vector.broadcast %cst_23 : f32 to vector<8x128xf32>
      %c0_24 = arith.constant 0 : index
      %c0_25 = arith.constant 0 : index
      %c0_26 = arith.constant 0 : index
      %34 = vector.load %arg5[%c0_24, %c0_25, %c0_26] : memref<1x8x128xf32, #tpu.memory_space<vmem>>, vector<1x8x128xf32>
      %35 = vector.shape_cast %34 : vector<1x8x128xf32> to vector<8x128xf32>
      %36 = vector.shape_cast %33 : vector<8x128xf32> to vector<1x8x128xf32>
      tpu.vector_store %arg5[%c0_24, %c0_25, %c0_26], %36 {strides = array<i32>} : memref<1x8x128xf32, #tpu.memory_space<vmem>>, vector<1x8x128xf32>,
    } else {
    }
    %c0 = arith.constant 0 : index
    %c0_1 = arith.constant 0 : index
    %3 = vector.load %arg3[%c0, %c0_1] : memref<16x128xf32, #tpu.memory_space<vmem>>, vector<16x128xf32>
    %c0_2 = arith.constant 0 : index
    %c0_3 = arith.constant 0 : index
    %4 = vector.load %arg2[%c0_2, %c0_3] : memref<16x128xf32, #tpu.memory_space<vmem>>, vector<16x128xf32>
    %cst = arith.constant -9.999000e+03 : f32
    %5 = vector.broadcast %cst : f32 to vector<16x128xf32>
    %6 = arith.cmpf one, %3, %5 : vector<16x128xf32>
    %7 = arith.subf %4, %3 : vector<16x128xf32>
    %cst_4 = arith.constant 0.000000e+00 : f32
    %8 = vector.broadcast %cst_4 : f32 to vector<16x128xf32>
    %9 = arith.select %6, %7, %8 : vector<16x128xi1>, vector<16x128xf32>
    %10 = arith.mulf %9, %9 : vector<16x128xf32>
    %11 = arith.extui %6 : vector<16x128xi1> to vector<16x128xi32>
    %12 = arith.sitofp %11 : vector<16x128xi32> to vector<16x128xf32>
    %c0_5 = arith.constant 0 : index
    %c0_6 = arith.constant 0 : index
    %c0_7 = arith.constant 0 : index
    %13 = vector.load %arg4[%c0_5, %c0_6, %c0_7] : memref<1x8x128xf32, #tpu.memory_space<vmem>>, vector<1x8x128xf32>
    %14 = vector.shape_cast %13 : vector<1x8x128xf32> to vector<8x128xf32>
    %15 = vector.shape_cast %10 : vector<16x128xf32> to vector<2x8x128xf32>
    %cst_8 = arith.constant dense<0.000000e+00> : vector<8x128xf32>
    %16 = vector.multi_reduction <add>, %15, %cst_8 [0] : vector<2x8x128xf32> to vector<8x128xf32>
    %17 = arith.addf %14, %16 : vector<8x128xf32>
    %c0_9 = arith.constant 0 : index
    %c0_10 = arith.constant 0 : index
    %c0_11 = arith.constant 0 : index
    %18 = vector.load %arg4[%c0_9, %c0_10, %c0_11] : memref<1x8x128xf32, #tpu.memory_space<vmem>>, vector<1x8x128xf32>
    %19 = vector.shape_cast %18 : vector<1x8x128xf32> to vector<8x128xf32>
    %20 = vector.shape_cast %17 : vector<8x128xf32> to vector<1x8x128xf32>
    tpu.vector_store %arg4[%c0_9, %c0_10, %c0_11], %20 {strides = array<i32>} : memref<1x8x128xf32, #tpu.memory_space<vmem>>, vector<1x8x128xf32>,
    %c0_12 = arith.constant 0 : index
    %c0_13 = arith.constant 0 : index
    %c0_14 = arith.constant 0 : index
    %21 = vector.load %arg5[%c0_12, %c0_13, %c0_14] : memref<1x8x128xf32, #tpu.memory_space<vmem>>, vector<1x8x128xf32>
    %22 = vector.shape_cast %21 : vector<1x8x128xf32> to vector<8x128xf32>
    %23 = vector.shape_cast %12 : vector<16x128xf32> to vector<2x8x128xf32>
    %cst_15 = arith.constant dense<0.000000e+00> : vector<8x128xf32>
    %24 = vector.multi_reduction <add>, %23, %cst_15 [0] : vector<2x8x128xf32> to vector<8x128xf32>
    %25 = arith.addf %22, %24 : vector<8x128xf32>
    %c0_16 = arith.constant 0 : index
    %c0_17 = arith.constant 0 : index
    %c0_18 = arith.constant 0 : index
    %26 = vector.load %arg5[%c0_16, %c0_17, %c0_18] : memref<1x8x128xf32, #tpu.memory_space<vmem>>, vector<1x8x128xf32>
    %27 = vector.shape_cast %26 : vector<1x8x128xf32> to vector<8x128xf32>
    %28 = vector.shape_cast %25 : vector<8x128xf32> to vector<1x8x128xf32>
    tpu.vector_store %arg5[%c0_16, %c0_17, %c0_18], %28 {strides = array<i32>} : memref<1x8x128xf32, #tpu.memory_space<vmem>>, vector<1x8x128xf32>,
    return
  }
  func.func @transform_0(%arg0: i32, %arg1: i32) -> (i32, i32) {
    %c1_i32 = arith.constant 1 : i32
    %0 = arith.muli %arg0, %c1_i32 : i32
    %1 = arith.addi %0, %arg1 : i32
    %c0_i32 = arith.constant 0 : i32
    %2 = arith.minsi %1, %c0_i32 : i32
    %c0_i32_0 = arith.constant 0 : i32
    %c0_i32_1 = arith.constant 0 : i32
    return %2, %c0_i32_0 : i32, i32
  }
  func.func @transform_1(%arg0: i32, %arg1: i32) -> (i32, i32) {
    %c1_i32 = arith.constant 1 : i32
    %0 = arith.muli %arg0, %c1_i32 : i32
    %1 = arith.addi %0, %arg1 : i32
    %c0_i32 = arith.constant 0 : i32
    %2 = arith.minsi %1, %c0_i32 : i32
    %c0_i32_0 = arith.constant 0 : i32
    %c0_i32_1 = arith.constant 0 : i32
    return %2, %c0_i32_0 : i32, i32
  }
  func.func @transform_2(%arg0: i32, %arg1: i32) -> (i32, i32, i32) {
    %c0_i32 = arith.constant 0 : i32
    %c0_i32_0 = arith.constant 0 : i32
    %c0_i32_1 = arith.constant 0 : i32
    return %arg0, %c0_i32, %c0_i32_0 : i32, i32, i32
  }
  func.func @transform_3(%arg0: i32, %arg1: i32) -> (i32, i32, i32) {
    %c0_i32 = arith.constant 0 : i32
    %c0_i32_0 = arith.constant 0 : i32
    %c0_i32_1 = arith.constant 0 : i32
    return %arg0, %c0_i32, %c0_i32_0 : i32, i32, i32
  }
}

</mosaic_0001>

<llo_original>
// kernel: tpu_custom_call.1
$region0: #{tpu_custom_call.1}
  #allocation0 [shape = 'u32[]', space=smem, size = 0x4, offset = 0x4, fixed_abs, tag = 'smem constant byte address 0x4 - core index']
  #allocation1 [shape = 'u32[144,128]{1,0:T(1,128)}', space=vmem, size = 0x12000, scoped, tag = 'internal scratch']
  %s0 = inlined_call_operand.hbm [shape: f32[16,128], index: 0, kind: input, shape index: {}]
  %s1 = inlined_call_operand.hbm [shape: f32[16,128], index: 1, kind: input, shape index: {}]
  %s2 = inlined_call_operand.hbm [shape: f32[1,8,128], index: 2, kind: output, shape index: {0}]
  %s3 = inlined_call_operand.hbm [shape: f32[1,8,128], index: 3, kind: output, shape index: {1}]
  %4 = xla_tuple %s2, %s3
  %s5 = sld [smem:[#allocation0]]
  $region38: #{tpu_custom_call.1} parent=0
    _
  %s7 = ssub.s32 1, %s5
  %s8 = scalar_select 0, %s7, %s5
  $region1: #{tpu_custom_call.1} parent=0
    #allocation2 [shape = 'u8[8192]{0}', space=vmem, size = 0x2000, scoped, tag = 'input window, operand 0, single buffered']
    #allocation3 [shape = 's32[1]{0}', space=sflag, size = 0x4, scoped, tag = 'scoped memory for tpu_custom_call.1']
    #allocation4 [shape = 's32[1]{0}', space=sflag, size = 0x4, scoped, tag = 'scoped memory for tpu_custom_call.1']
    #allocation5 [shape = 'u8[8192]{0}', space=vmem, size = 0x2000, scoped, tag = 'input window, operand 1, single buffered']
    #allocation6 [shape = 's32[1]{0}', space=sflag, size = 0x4, scoped, tag = 'scoped memory for tpu_custom_call.1']
    #allocation7 [shape = 'u8[4096]{0}', space=vmem, size = 0x1000, scoped, tag = 'output window, operand 0, single buffered']
    #allocation8 [shape = 'u8[4096]{0}', space=vmem, size = 0x1000, scoped, tag = 'output window, operand 1, single buffered']
    #allocation9 [shape = 's32[1]{0}', space=sflag, size = 0x4, scoped, tag = 'scoped memory for tpu_custom_call.1']
    %9 = vsyncpa [#allocation3], 0
    %10 = vsyncpa [#allocation6], 0
    %11 = vsyncpa [#allocation4], 0
    %12 = vsyncpa [#allocation9], 0
    // Predicated region
    $region2: #{tpu_custom_call.1} parent=1 // pred_check
      _
    $region3: #{tpu_custom_call.1} parent=1 // pred_check_branch
      %14 = sbr.rel (0) target = $region5
    $region4: #{tpu_custom_call.1} parent=1 // pred_region
      %s15 = sadd.s32 0, 0
      %p16 = scmp.lt.s32.totalorder %s15, 0
      %s17 = scalar_select %p16, %s15, 0
      %s18 = smul.u32 2, %s17
      %s20 = ssub.s32 256, 256
      %21 = vsyncadd [#allocation3], %s20
      %s22 = smul.addr %s18, 128
      %s23 = scalar_lea.hbm %s0, %s22
      %s24 = sshll.u32 [#allocation2], 4
      %s25 = int_to_ptr.vmem [resolvable:$true] %s24
      %30 = dma.hbm_to_vmem [thread:$0]  %s23, 256, %s25, [#allocation3], 128, 128, 8
    $region5: #{tpu_custom_call.1} parent=1 // pred_fallthru
      _
    // Predicated region
    $region6: #{tpu_custom_call.1} parent=1 // pred_check
      _
    $region7: #{tpu_custom_call.1} parent=1 // pred_check_branch
      %32 = sbr.rel (0) target = $region9
    $region8: #{tpu_custom_call.1} parent=1 // pred_region
      %s33 = sadd.s32 0, 0
      %p34 = scmp.lt.s32.totalorder %s33, 0
      %s35 = scalar_select %p34, %s33, 0
      %s36 = smul.u32 2, %s35
      %s38 = ssub.s32 256, 256
      %39 = vsyncadd [#allocation6], %s38
      %s40 = smul.addr %s36, 128
      %s41 = scalar_lea.hbm %s1, %s40
      %s42 = sshll.u32 [#allocation5], 4
      %s43 = int_to_ptr.vmem [resolvable:$true] %s42
      %48 = dma.hbm_to_vmem [thread:$0]  %s41, 256, %s43, [#allocation6], 128, 128, 8
    $region9: #{tpu_custom_call.1} parent=1 // pred_fallthru
      _
    // Predicated region
    $region10: #{tpu_custom_call.1} parent=1 // pred_check
      _
    $region11: #{tpu_custom_call.1} parent=1 // pred_check_branch
      %50 = sbr.rel (0) target = $region13
    $region12: #{tpu_custom_call.1} parent=1 // pred_region
      %51 = dma.done [#allocation3], 256
    $region13: #{tpu_custom_call.1} parent=1 // pred_fallthru
      _
    // Predicated region
    $region14: #{tpu_custom_call.1} parent=1 // pred_check
      _
    $region15: #{tpu_custom_call.1} parent=1 // pred_check_branch
      %53 = sbr.rel (0) target = $region17
    $region16: #{tpu_custom_call.1} parent=1 // pred_region
      %54 = dma.done [#allocation6], 256
    $region17: #{tpu_custom_call.1} parent=1 // pred_fallthru
      _
    %s55 = sadd.s32 0, 0
    %p56 = scmp.lt.s32.totalorder %s55, 0
    %s57 = scalar_select %p56, %s55, 0
    %s58 = smul.u32 2, %s57
    %s59 = sadd.s32 0, 0
    %p60 = scmp.lt.s32.totalorder %s59, 0
    %s61 = scalar_select %p60, %s59, 0
    %s62 = smul.u32 2, %s61
    %p63 = scmp.eq.s32.totalorder 0, 0
    // Predicated region
    $region18: #{tpu_custom_call.1} parent=1 // pred_check
      %p64 = pneg %p63
    $region19: #{tpu_custom_call.1} parent=1 // pred_check_branch
      %66 = sbr.rel (%p64) target = $region21
    $region20: #{tpu_custom_call.1} parent=1 // pred_region
      %67 = vst [vmem:[#allocation7] sm:$0xff] 0.0
      %68 = vst [vmem:[#allocation8] sm:$0xff] 0.0
    $region21: #{tpu_custom_call.1} parent=1 // pred_fallthru
      _
    %v69 = vld [vmem:[#allocation5] sm:$0xff]
    %v70 = vld [vmem:[#allocation5 + $0x8] sm:$0xff]
    %v71 = vld [vmem:[#allocation2] sm:$0xff]
    %v72 = vld [vmem:[#allocation2 + $0x8] sm:$0xff]
    %vm73 = vcmp.ne.f32.partialorder %v69, -9999.0
    %vm74 = vcmp.ne.f32.partialorder %v70, -9999.0
    %v75 = vsub.f32 %v71, %v69
    %v76 = vsub.f32 %v72, %v70
    %v77 = vsel %vm73, %v75, 0.0
    %v78 = vsel %vm74, %v76, 0.0
    %v79 = vmul.f32 %v77, %v77
    %v80 = vmul.f32 %v78, %v78
    %v81 = vsel %vm73, 1, 0
    %v82 = vsel %vm74, 1, 0
    %v83 = vcvt.s32.f32 %v81
    %v84 = vcvt.s32.f32 %v82
    %v85 = vld [vmem:[#allocation7] sm:$0xff]
    %v86 = vadd.f32 %v79, %v80
    %v87 = vadd.f32 %v85, %v86
    %88 = vst [vmem:[#allocation7] sm:$0xff] %v87
    %v89 = vld [vmem:[#allocation8] sm:$0xff]
    %v90 = vadd.f32 %v83, %v84
    %v91 = vadd.f32 %v89, %v90
    %92 = vst [vmem:[#allocation8] sm:$0xff] %v91
    // Predicated region
    $region22: #{tpu_custom_call.1} parent=1 // pred_check
      _
    $region23: #{tpu_custom_call.1} parent=1 // pred_check_branch
      %94 = sbr.rel (0) target = $region25
    $region24: #{tpu_custom_call.1} parent=1 // pred_region
      %s96 = ssub.s32 128, 128
      %97 = vsyncadd [#allocation4], %s96
      %s99 = sshll.u32 [#allocation7], 4
      %s100 = int_to_ptr.vmem [resolvable:$true] %s99
      %102 = dma.vmem_to_hbm [thread:$0]  %s100, 128, %s2, [#allocation4]
    $region25: #{tpu_custom_call.1} parent=1 // pred_fallthru
      _
    // Predicated region
    $region26: #{tpu_custom_call.1} parent=1 // pred_check
      _
    $region27: #{tpu_custom_call.1} parent=1 // pred_check_branch
      %104 = sbr.rel (0) target = $region29
    $region28: #{tpu_custom_call.1} parent=1 // pred_region
      %s106 = ssub.s32 128, 128
      %107 = vsyncadd [#allocation9], %s106
      %s109 = sshll.u32 [#allocation8], 4
      %s110 = int_to_ptr.vmem [resolvable:$true] %s109
      %112 = dma.vmem_to_hbm [thread:$0]  %s110, 128, %s3, [#allocation9]
    $region29: #{tpu_custom_call.1} parent=1 // pred_fallthru
      _
    // Predicated region
    $region30: #{tpu_custom_call.1} parent=1 // pred_check
      _
    $region31: #{tpu_custom_call.1} parent=1 // pred_check_branch
      %114 = sbr.rel (0) target = $region33
    $region32: #{tpu_custom_call.1} parent=1 // pred_region
      %115 = dma.done [#allocation4], 128
    $region33: #{tpu_custom_call.1} parent=1 // pred_fallthru
      _
    // Predicated region
    $region34: #{tpu_custom_call.1} parent=1 // pred_check
      _
    $region35: #{tpu_custom_call.1} parent=1 // pred_check_branch
      %117 = sbr.rel (0) target = $region37
    $region36: #{tpu_custom_call.1} parent=1 // pred_region
      %118 = dma.done [#allocation9], 128
    $region37: #{tpu_custom_call.1} parent=1 // pred_fallthru
      _
    %119 = vsyncpa [#allocation3], 1
    %120 = vsyncpa [#allocation6], 1
    %121 = vsyncpa [#allocation4], 1
    %122 = vsyncpa [#allocation9], 1

</llo_original>
